<compile_context>
chip_gen: v7x
topology: tpu7x:2x2x1
jax: 0.10.0
libtpu: 0.0.40
codegen_flags: <defaults>
</compile_context>

<pallas_src>
import jax
import jax.numpy as jnp
from jax.experimental import pallas as pl
from jax.experimental.pallas import tpu as pltpu


def a2b_fused_kernel(x_ref, w_ref, b_ref, o_ref):
    # x_ref: (TN, D) f32   w_ref: (D, D) compute dtype   b_ref: (1, D) f32
    x = x_ref[...]                              # residual path stays in f32
    xc = x.astype(w_ref.dtype)                  # bf16 cast (if enabled) feeds the MXU
    xw = jnp.dot(xc, w_ref[...], preferred_element_type=jnp.float32)
    o_ref[...] = (x + xw + b_ref[...]).astype(o_ref.dtype)


def a2b_forward(x, w_enc, b_enc, w_dec, b_dec, *,
                compute_dtype=jnp.float32, row_tile=512):
    """A2B forward. x: (N, H, L). Weights stored (in_features, out_features)."""
    N, H, L = x.shape
    D = H * L
    hidden = w_enc.shape[1]
    assert w_enc.shape == (D, hidden) and w_dec.shape == (hidden, D)
    assert b_enc.shape == (hidden,) and b_dec.shape == (D,)

    # Exact algebraic fusion of the two Linears (done once, in f32).
    w_fused = jnp.dot(w_enc, w_dec, preferred_element_type=jnp.float32)      # (D, D)
    b_fused = (jnp.dot(b_enc, w_dec, preferred_element_type=jnp.float32)
               + b_dec).reshape(1, D)                                        # (1, D)
    # Optional bf16 weights for the MXU (wins on v6e/v7x); accumulation is
    # forced to f32 and the bias / residual adds stay in f32 in the kernel.
    w_fused = w_fused.astype(compute_dtype)

    x_flat = x.reshape(N, D)

    # Row tiling: one block at small N (per-grid-step overhead ~0.35us would
    # dominate otherwise); 512-row tiles once N grows so BlockSpec
    # double-buffering hides the HBM DMA behind the matmul.
    # Per-block VMEM (TN=512, f32): 2 x tiles (512 KiB) + 2 out tiles (512 KiB)
    # + W (64 KiB) -- far under the scoped budget on v5e/v6e (32 MiB) and the
    # smaller v7x VMEM (64 MiB physical).
    tn = N if N <= row_tile else row_tile
    grid = (pl.cdiv(N, tn),)

    out_flat = pl.pallas_call(
        a2b_fused_kernel,
        out_shape=jax.ShapeDtypeStruct((N, D), x.dtype),
        grid=grid,
        in_specs=[
            pl.BlockSpec((tn, D), lambda i: (i, 0)),   # x row tile
            pl.BlockSpec((D, D), lambda i: (0, 0)),    # fused weight (resident)
            pl.BlockSpec((1, D), lambda i: (0, 0)),    # fused bias   (resident)
        ],
        out_specs=pl.BlockSpec((tn, D), lambda i: (i, 0)),
        # Row axis is embarrassingly parallel -> megacore sharding on v7x.
        compiler_params=pltpu.CompilerParams(
            dimension_semantics=("parallel",)),
        # NOTE: input_output_aliases={0: 0} would be safe (x is fully loaded
        # into vregs before o_ref is written) and saves one HBM output buffer
        # when x_flat is donated; it is left off here so the caller's x stays
        # valid for the reference check in __main__.
    )(x_flat, w_fused, b_fused)

    return out_flat.reshape(N, H, L)


if __name__ == "__main__":
    # Module config: d_model=32, nhead=4, hidden_size=64  ->  D = 128
    d_model, nhead, hidden_size = 32, 4, 64
    N, H, L = 8, nhead, d_model
    D = d_model * nhead

    key = jax.random.PRNGKey(0)
    kx, k1, k2, k3, k4 = jax.random.split(key, 5)

    x = jax.random.normal(kx, (N, H, L), dtype=jnp.float32)

    # Deterministic parameter init (uniform, torch Linear default bounds).
    lim_enc = 1.0 / (D ** 0.5)
    lim_dec = 1.0 / (hidden_size ** 0.5)
    w_enc = jax.random.uniform(k1, (D, hidden_size), jnp.float32, -lim_enc, lim_enc)
    b_enc = jax.random.uniform(k2, (hidden_size,), jnp.float32, -lim_enc, lim_enc)
    w_dec = jax.random.uniform(k3, (hidden_size, D), jnp.float32, -lim_dec, lim_dec)
    b_dec = jax.random.uniform(k4, (D,), jnp.float32, -lim_dec, lim_dec)

    # Pure-JAX reference of the *unfused* module semantics.
    x_flat = x.reshape(N, D)
    ref = (x_flat + (x_flat @ w_enc + b_enc) @ w_dec + b_dec).reshape(N, H, L)

    # f32 path (default).
    out = a2b_forward(x, w_enc, b_enc, w_dec, b_dec)
    jax.block_until_ready(out)
    assert out.shape == (N, H, L)
    assert jnp.allclose(out, ref, atol=1e-4, rtol=1e-4)

    # bf16-weight path (recommended on v6e/v7x at scale); f32 accumulate +
    # f32 residual, so only the matmul contribution carries bf16 rounding.
    out_bf16 = a2b_forward(x, w_enc, b_enc, w_dec, b_dec,
                           compute_dtype=jnp.bfloat16)
    jax.block_until_ready(out_bf16)
    assert jnp.allclose(out_bf16, ref, atol=5e-2, rtol=5e-2)

    print("KERNEL_OK")
</pallas_src>

<mosaic_0001>
module attributes {stable_mosaic.version = 11 : i64} {
  func.func @a2b_fused_kernel(%arg0: i32, %arg1: memref<8x128xf32, #tpu.memory_space<vmem>>, %arg2: memref<128x128xf32, #tpu.memory_space<vmem>>, %arg3: memref<1x128xf32, #tpu.memory_space<vmem>>, %arg4: memref<8x128xf32, #tpu.memory_space<vmem>>) attributes {dimension_semantics = [#tpu.dimension_semantics<parallel>], iteration_bounds = array<i64: 1>, scalar_prefetch = 0 : i64, scratch_operands = 0 : i64, tpu.core_type = #tpu.core_type<tc>, window_params = [{transform_indices = @transform_0, window_bounds = array<i64: 8, 128>}, {pipeline_mode = #tpu.pipeline_mode<synchronous>, transform_indices = @transform_1, window_bounds = array<i64: 128, 128>}, {pipeline_mode = #tpu.pipeline_mode<synchronous>, transform_indices = @transform_2, window_bounds = array<i64: 1, 128>}, {transform_indices = @transform_3, window_bounds = array<i64: 8, 128>}]} {
    %c0 = arith.constant 0 : index
    %c0_0 = arith.constant 0 : index
    %0 = vector.load %arg1[%c0, %c0_0] : memref<8x128xf32, #tpu.memory_space<vmem>>, vector<8x128xf32>
    %c0_1 = arith.constant 0 : index
    %c0_2 = arith.constant 0 : index
    %1 = vector.load %arg2[%c0_1, %c0_2] : memref<128x128xf32, #tpu.memory_space<vmem>>, vector<128x128xf32>
    %cst = arith.constant dense<0.000000e+00> : vector<8x128xf32>
    %2 = tpu.matmul %0, %1, %cst {dimension_numbers = #tpu.dot_dimension_numbers<[1], [0], [0], [1], [0, 0, 1, 1], [], []>} : vector<8x128xf32>, vector<128x128xf32>, vector<8x128xf32> -> vector<8x128xf32>
    %3 = arith.addf %0, %2 : vector<8x128xf32>
    %c0_3 = arith.constant 0 : index
    %c0_4 = arith.constant 0 : index
    %4 = vector.load %arg3[%c0_3, %c0_4] : memref<1x128xf32, #tpu.memory_space<vmem>>, vector<1x128xf32>
    %5 = vector.broadcast %4 : vector<1x128xf32> to vector<8x128xf32>
    %6 = arith.addf %3, %5 : vector<8x128xf32>
    %c0_5 = arith.constant 0 : index
    %c0_6 = arith.constant 0 : index
    %7 = vector.load %arg4[%c0_5, %c0_6] : memref<8x128xf32, #tpu.memory_space<vmem>>, vector<8x128xf32>
    tpu.vector_store %arg4[%c0_5, %c0_6], %6 {strides = array<i32>} : memref<8x128xf32, #tpu.memory_space<vmem>>, vector<8x128xf32>,
    return
  }
  func.func @transform_0(%arg0: i32) -> (i32, i32) {
    %c0_i32 = arith.constant 0 : i32
    %c0_i32_0 = arith.constant 0 : i32
    return %arg0, %c0_i32 : i32, i32
  }
  func.func @transform_1(%arg0: i32) -> (i32, i32) {
    %c0_i32 = arith.constant 0 : i32
    %c0_i32_0 = arith.constant 0 : i32
    %c0_i32_1 = arith.constant 0 : i32
    return %c0_i32, %c0_i32_0 : i32, i32
  }
  func.func @transform_2(%arg0: i32) -> (i32, i32) {
    %c0_i32 = arith.constant 0 : i32
    %c0_i32_0 = arith.constant 0 : i32
    %c0_i32_1 = arith.constant 0 : i32
    return %c0_i32, %c0_i32_0 : i32, i32
  }
  func.func @transform_3(%arg0: i32) -> (i32, i32) {
    %c0_i32 = arith.constant 0 : i32
    %c0_i32_0 = arith.constant 0 : i32
    return %arg0, %c0_i32 : i32, i32
  }
}

</mosaic_0001>

<llo_original>
// kernel: tpu_custom_call.1
$region0: #{tpu_custom_call.1}
  #allocation0 [shape = 'u32[]', space=smem, size = 0x4, offset = 0x4, fixed_abs, tag = 'smem constant byte address 0x4 - core index']
  #allocation1 [shape = 'u32[144,128]{1,0:T(1,128)}', space=vmem, size = 0x12000, scoped, tag = 'internal scratch']
  %s0 = inlined_call_operand.hbm [shape: f32[8,128], index: 0, kind: input, shape index: {}]
  %s1 = inlined_call_operand.hbm [shape: f32[128,128], index: 1, kind: input, shape index: {}]
  %s2 = inlined_call_operand.vmem [shape: f32[1,128], index: 2, kind: input, shape index: {}]
  %s3 = inlined_call_operand.hbm [shape: f32[8,128], index: 3, kind: output, shape index: {}]
  %s4 = sld [smem:[#allocation0]]
  $region30: #{tpu_custom_call.1} parent=0
    _
  %s6 = ssub.s32 1, %s4
  %s7 = scalar_select 0, %s6, %s4
  $region1: #{tpu_custom_call.1} parent=0
    #allocation2 [shape = 'u8[4096]{0}', space=vmem, size = 0x1000, scoped, tag = 'input window, operand 0, single buffered']
    #allocation3 [shape = 's32[1]{0}', space=sflag, size = 0x4, scoped, tag = 'scoped memory for tpu_custom_call.1']
    #allocation4 [shape = 's32[1]{0}', space=sflag, size = 0x4, scoped, tag = 'scoped memory for tpu_custom_call.1']
    #allocation5 [shape = 'u8[65536]{0}', space=vmem, size = 0x10000, scoped, tag = 'input window, operand 1, single buffered']
    #allocation6 [shape = 's32[1]{0}', space=sflag, size = 0x4, scoped, tag = 'scoped memory for tpu_custom_call.1']
    #allocation7 [shape = 'u8[4096]{0}', space=vmem, size = 0x1000, scoped, tag = 'output window, operand 0, single buffered']
    %8 = vsyncpa [#allocation3], 0
    %9 = vsyncpa [#allocation6], 0
    %10 = vsyncpa [#allocation4], 0
    // Predicated region
    $region2: #{tpu_custom_call.1} parent=1 // pred_check
      _
    $region3: #{tpu_custom_call.1} parent=1 // pred_check_branch
      %12 = sbr.rel (0) target = $region5
    $region4: #{tpu_custom_call.1} parent=1 // pred_region
      %s14 = ssub.s32 128, 128
      %15 = vsyncadd [#allocation3], %s14
      %s17 = sshll.u32 [#allocation2], 4
      %s18 = int_to_ptr.vmem [resolvable:$true] %s17
      %20 = dma.hbm_to_vmem [thread:$0]  %s0, 128, %s18, [#allocation3]
    $region5: #{tpu_custom_call.1} parent=1 // pred_fallthru
      _
    // Predicated region
    $region6: #{tpu_custom_call.1} parent=1 // pred_check
      _
    $region7: #{tpu_custom_call.1} parent=1 // pred_check_branch
      %22 = sbr.rel (0) target = $region9
    $region8: #{tpu_custom_call.1} parent=1 // pred_region
      %s24 = ssub.s32 2048, 2048
      %25 = vsyncadd [#allocation6], %s24
      %s26 = sshll.u32 [#allocation5], 4
      %s27 = int_to_ptr.vmem [resolvable:$true] %s26
      %32 = dma.hbm_to_vmem [thread:$0]  %s1, 2048, %s27, [#allocation6], 128, 128, 8
    $region9: #{tpu_custom_call.1} parent=1 // pred_fallthru
      _
    // Predicated region
    $region10: #{tpu_custom_call.1} parent=1 // pred_check
      _
    $region11: #{tpu_custom_call.1} parent=1 // pred_check_branch
      %34 = sbr.rel (0) target = $region13
    $region12: #{tpu_custom_call.1} parent=1 // pred_region
      _
    $region13: #{tpu_custom_call.1} parent=1 // pred_fallthru
      _
    // Predicated region
    $region14: #{tpu_custom_call.1} parent=1 // pred_check
      _
    $region15: #{tpu_custom_call.1} parent=1 // pred_check_branch
      %36 = sbr.rel (0) target = $region17
    $region16: #{tpu_custom_call.1} parent=1 // pred_region
      %37 = dma.done [#allocation3], 128
    $region17: #{tpu_custom_call.1} parent=1 // pred_fallthru
      _
    // Predicated region
    $region18: #{tpu_custom_call.1} parent=1 // pred_check
      _
    $region19: #{tpu_custom_call.1} parent=1 // pred_check_branch
      %39 = sbr.rel (0) target = $region21
    $region20: #{tpu_custom_call.1} parent=1 // pred_region
      %40 = dma.done [#allocation6], 2048
    $region21: #{tpu_custom_call.1} parent=1 // pred_fallthru
      _
    %v41 = vld [vmem:[#allocation2] sm:$0xff]
    %v42 = vld [vmem:[#allocation5] sm:$0xff]
    %v43 = vld [vmem:[#allocation5 + $0x8] sm:$0xff]
    %v44 = vld [vmem:[#allocation5 + $0x10] sm:$0xff]
    %v45 = vld [vmem:[#allocation5 + $0x18] sm:$0xff]
    %v46 = vld [vmem:[#allocation5 + $0x20] sm:$0xff]
    %v47 = vld [vmem:[#allocation5 + $0x28] sm:$0xff]
    %v48 = vld [vmem:[#allocation5 + $0x30] sm:$0xff]
    %v49 = vld [vmem:[#allocation5 + $0x38] sm:$0xff]
    %v50 = vld [vmem:[#allocation5 + $0x40] sm:$0xff]
    %v51 = vld [vmem:[#allocation5 + $0x48] sm:$0xff]
    %v52 = vld [vmem:[#allocation5 + $0x50] sm:$0xff]
    %v53 = vld [vmem:[#allocation5 + $0x58] sm:$0xff]
    %v54 = vld [vmem:[#allocation5 + $0x60] sm:$0xff]
    %v55 = vld [vmem:[#allocation5 + $0x68] sm:$0xff]
    %v56 = vld [vmem:[#allocation5 + $0x70] sm:$0xff]
    %v57 = vld [vmem:[#allocation5 + $0x78] sm:$0xff]
    %58 = vmatprep.subr.mxu0 0.0
    %59 = vmatpush1.msra.mxu0 %v42
    %60 = vmatprep.subr.mxu0 0.0
    %61 = vmatpush1.msra.mxu0 %v43
    %62 = vmatprep.subr.mxu0 0.0
    %63 = vmatpush1.msra.mxu0 %v44
    %64 = vmatprep.subr.mxu0 0.0
    %65 = vmatpush1.msra.mxu0 %v45
    %66 = vmatprep.subr.mxu0 0.0
    %67 = vmatpush1.msra.mxu0 %v46
    %68 = vmatprep.subr.mxu0 0.0
    %69 = vmatpush1.msra.mxu0 %v47
    %70 = vmatprep.subr.mxu0 0.0
    %71 = vmatpush1.msra.mxu0 %v48
    %72 = vmatprep.subr.mxu0 0.0
    %73 = vmatpush1.msra.mxu0 %v49
    %74 = vmatprep.subr.mxu0 0.0
    %75 = vmatpush1.msra.mxu0 %v50
    %76 = vmatprep.subr.mxu0 0.0
    %77 = vmatpush1.msra.mxu0 %v51
    %78 = vmatprep.subr.mxu0 0.0
    %79 = vmatpush1.msra.mxu0 %v52
    %80 = vmatprep.subr.mxu0 0.0
    %81 = vmatpush1.msra.mxu0 %v53
    %82 = vmatprep.subr.mxu0 0.0
    %83 = vmatpush1.msra.mxu0 %v54
    %84 = vmatprep.subr.mxu0 0.0
    %85 = vmatpush1.msra.mxu0 %v55
    %86 = vmatprep.subr.mxu0 0.0
    %87 = vmatpush1.msra.mxu0 %v56
    %88 = vmatprep.subr.mxu0 0.0
    %89 = vmatpush1.msra.mxu0 %v57
    %90 = vmatprep.subr.mxu0 0.0
    %91 = vmatpush1.msra.mxu0 0.0
    %92 = vmatprep.subr.mxu0 0.0
    %93 = vmatpush1.msra.mxu0 0.0
    %94 = vmatprep.subr.mxu0 0.0
    %95 = vmatpush1.msra.mxu0 0.0
    %96 = vmatprep.subr.mxu0 0.0
    %97 = vmatpush1.msra.mxu0 0.0
    %98 = vmatprep.subr.mxu0 0.0
    %99 = vmatpush1.msra.mxu0 0.0
    %100 = vmatprep.subr.mxu0 0.0
    %101 = vmatpush1.msra.mxu0 0.0
    %102 = vmatprep.subr.mxu0 0.0
    %103 = vmatpush1.msra.mxu0 0.0
    %104 = vmatprep.subr.mxu0 0.0
    %105 = vmatpush1.msra.mxu0 0.0
    %106 = vmatprep.subr.mxu0 0.0
    %107 = vmatpush1.msra.mxu0 0.0
    %108 = vmatprep.subr.mxu0 0.0
    %109 = vmatpush1.msra.mxu0 0.0
    %110 = vmatprep.subr.mxu0 0.0
    %111 = vmatpush1.msra.mxu0 0.0
    %112 = vmatprep.subr.mxu0 0.0
    %113 = vmatpush1.msra.mxu0 0.0
    %114 = vmatprep.subr.mxu0 0.0
    %115 = vmatpush1.msra.mxu0 0.0
    %116 = vmatprep.subr.mxu0 0.0
    %117 = vmatpush1.msra.mxu0 0.0
    %118 = vmatprep.subr.mxu0 0.0
    %119 = vmatpush1.msra.mxu0 0.0
    %120 = vmatprep.subr.mxu0 0.0
    %121 = vmatpush1.msra.mxu0 0.0
    %122 = vmatprep.mubr.f32.mxu0 0.0
    %123 = vmatmul.mubr.f32.gmra.mrb[0].mxu0 %v41
    %v124 = vpop.f32.mrb[0].mxu0
    %v125 = vadd.f32 0.0, %v124
    %v126 = vpop.f32.mrb[0].mxu0
    %127 = vdwg.mxu0
    %v128 = vadd.f32 %v41, %v125
    %v129 = vld [vmem:[%s2] sm:$0x1]
    %v131 = vlaneseq
    %v132 = vshrl.u32 %v131, 7
    %v133 = vsub.s32 0, %v132
    %v134 = vrot.slane %v129, %v133
    %v136 = vadd.f32 %v128, %v134
    %137 = vst [vmem:[#allocation7] sm:$0xff] %v136
    // Predicated region
    $region22: #{tpu_custom_call.1} parent=1 // pred_check
      _
    $region23: #{tpu_custom_call.1} parent=1 // pred_check_branch
      %139 = sbr.rel (0) target = $region25
    $region24: #{tpu_custom_call.1} parent=1 // pred_region
      %s141 = ssub.s32 128, 128
      %142 = vsyncadd [#allocation4], %s141
      %s144 = sshll.u32 [#allocation7], 4
      %s145 = int_to_ptr.vmem [resolvable:$true] %s144
      %147 = dma.vmem_to_hbm [thread:$0]  %s145, 128, %s3, [#allocation4]
    $region25: #{tpu_custom_call.1} parent=1 // pred_fallthru
      _
    // Predicated region
    $region26: #{tpu_custom_call.1} parent=1 // pred_check
      _
    $region27: #{tpu_custom_call.1} parent=1 // pred_check_branch
      %149 = sbr.rel (0) target = $region29
    $region28: #{tpu_custom_call.1} parent=1 // pred_region
      %150 = dma.done [#allocation4], 128
    $region29: #{tpu_custom_call.1} parent=1 // pred_fallthru
      _
    %151 = vsyncpa [#allocation3], 1
    %152 = vsyncpa [#allocation6], 1
    %153 = vsyncpa [#allocation4], 1

</llo_original>
